<compile_context>
chip_gen: v5e
topology: v5e:2x2
jax: 0.10.0
libtpu: 0.0.40
codegen_flags: <defaults>
</compile_context>

<pallas_src>
import jax
import jax.numpy as jnp
from jax.experimental import pallas as pl
from jax.experimental.pallas import tpu as pltpu

LANE = 128
BF16_SUBLANE = 16      # bf16 packs 16 rows per vreg
SPLIT_ROWS = 256       # min rows/step before forcing a 2-way split (v7x megacore)


def _round_up(n, m):
    return ((n + m - 1) // m) * m


def _cdiv(a, b):
    return -(-a // b)


def _dqn_kernel(x_ref, w01_ref, b01_ref, w2_ref, b2_ref, q_ref):
    # Folded (embedding ∘ fc1): bf16 MXU matmul, f32 accumulate, f32 bias+ReLU.
    x = x_ref[...]
    h = jnp.dot(x, w01_ref[...], preferred_element_type=jnp.float32) + b01_ref[...]
    h = jnp.maximum(h, 0.0)
    # fc2 -> Q-values (bf16 MXU operands, f32 accumulate, bf16 writeback).
    q = jnp.dot(h.astype(jnp.bfloat16), w2_ref[...],
                preferred_element_type=jnp.float32) + b2_ref[...]
    q_ref[...] = q.astype(q_ref.dtype)


def prepare_params(we, be, w1, b1, w2, b2):
    """One-time prep:
      * fold embedding and fc1 (no nonlinearity between them) in f32:
            W01 = We @ W1,   b01 = be @ W1 + b1
      * zero-pad hidden / action dims up to multiples of 128 (lane-dense
        intermediate + unmasked q stores); input dim is left un-padded.
      * cast MXU weight operands to bf16; keep biases as f32 (1, N) rows.
    """
    def pad2(a, rows, cols, dtype):
        out = jnp.zeros((rows, cols), dtype)
        return out.at[: a.shape[0], : a.shape[1]].set(a.astype(dtype))

    we = we.astype(jnp.float32)
    w1 = w1.astype(jnp.float32)
    w01 = we @ w1                                                   # (in_dim, hidden)
    b01 = be.reshape(1, -1).astype(jnp.float32) @ w1 + b1.reshape(1, -1).astype(jnp.float32)

    in_dim = w01.shape[0]
    hid_p = _round_up(w01.shape[1], LANE)
    act_p = _round_up(w2.shape[1], LANE)

    return (
        pad2(w01, in_dim, hid_p, jnp.bfloat16),
        pad2(b01, 1, hid_p, jnp.float32),
        pad2(w2, hid_p, act_p, jnp.bfloat16),
        pad2(b2.reshape(1, -1), 1, act_p, jnp.float32),
    )


def dqn_forward(x, padded_params, action_dim, *, max_tile_b=1024):
    """Fused DQNAgent forward on folded/padded params. Returns (batch, action_dim) f32."""
    w01, b01, w2, b2 = padded_params
    batch, in_dim = x.shape
    assert w01.shape[0] == in_dim
    act_p = w2.shape[1]

    # --- batch tiling -------------------------------------------------------
    # Pad batch to a multiple of 16, then choose the fewest equal-size grid
    # steps under max_tile_b (per-step overhead ~0.35us => fewer/larger steps
    # win).  For large batches force >= 2 steps so ("parallel",) semantics can
    # shard the batch axis across v7x's 2 TensorCores.
    batch16 = _round_up(batch, BF16_SUBLANE)
    n_steps = _cdiv(batch16, max_tile_b)
    if batch16 >= 2 * SPLIT_ROWS:
        n_steps = max(n_steps, 2)
    tile_b = _round_up(_cdiv(batch16, n_steps), BF16_SUBLANE)
    batch_p = n_steps * tile_b

    # Only cast + row-pad x (feature dim stays un-padded: no 8x inflated stream).
    x_p = x.astype(jnp.bfloat16)
    if batch_p != batch:
        x_p = jnp.pad(x_p, ((0, batch_p - batch), (0, 0)))

    # --- VMEM budget ----------------------------------------------------------
    # Single-buffered resident weights/biases + double-buffered x / q tiles,
    # +25% headroom + 2 MiB compiler scratch, capped below v7x's 64 MiB.
    resident_bytes = 2 * (w01.size + w2.size) + 4 * (b01.size + b2.size)
    stream_bytes = 2 * (tile_b * in_dim * 2) + 2 * (tile_b * act_p * 2)
    vmem_bytes = int(min(48 << 20,
                         max(8 << 20,
                             int(1.25 * (resident_bytes + stream_bytes)) + (2 << 20))))

    # Resident operands: constant index_map, single VMEM buffer, DMA'd once.
    def resident(a):
        return pl.BlockSpec(a.shape, lambda i: (0, 0), pipeline_mode=pl.Buffered(1))

    q_p = pl.pallas_call(
        _dqn_kernel,
        out_shape=jax.ShapeDtypeStruct((batch_p, act_p), jnp.bfloat16),
        grid=(n_steps,),
        in_specs=[
            pl.BlockSpec((tile_b, in_dim), lambda i: (i, 0)),   # x: streamed over batch
            resident(w01), resident(b01),
            resident(w2), resident(b2),
        ],
        out_specs=pl.BlockSpec((tile_b, act_p), lambda i: (i, 0)),
        compiler_params=pltpu.CompilerParams(
            dimension_semantics=("parallel",),   # megacore-shards batch steps on v7x
            vmem_limit_bytes=vmem_bytes,
        ),
    )(x_p, w01, b01, w2, b2)

    # Slice away padded batch rows / action lanes; hand back f32 Q-values.
    return q_p[:batch, :action_dim].astype(jnp.float32)


def init_params(key, input_dim, hidden_dim, action_dim, emb_dim):
    """Deterministic synthetic params mirroring nn.Linear shapes (transposed
    to [in, out] so the kernel does x @ W directly)."""
    ks = jax.random.split(key, 6)
    we = jax.random.normal(ks[0], (input_dim, emb_dim), jnp.float32) * 0.1
    be = jax.random.normal(ks[1], (1, emb_dim), jnp.float32) * 0.1
    w1 = jax.random.normal(ks[2], (emb_dim, hidden_dim), jnp.float32) * 0.1
    b1 = jax.random.normal(ks[3], (1, hidden_dim), jnp.float32) * 0.1
    w2 = jax.random.normal(ks[4], (hidden_dim, action_dim), jnp.float32) * 0.1
    b2 = jax.random.normal(ks[5], (1, action_dim), jnp.float32) * 0.1
    return we, be, w1, b1, w2, b2


if __name__ == "__main__":
    # Small shapes consistent with the module's forward.
    batch, input_dim, emb_dim, hidden_dim, action_dim = 8, 16, 32, 32, 8

    key = jax.random.PRNGKey(0)
    kx, kp = jax.random.split(key)
    x = jax.random.normal(kx, (batch, input_dim), jnp.float32)
    params = init_params(kp, input_dim, hidden_dim, action_dim, emb_dim)

    # Fold / pad / cast once at init time; this layout is kept end-to-end.
    padded = prepare_params(*params)

    q = dqn_forward(x, padded, action_dim)
    q = jax.block_until_ready(q)

    # Pure-JAX f32 reference (un-folded). The kernel uses bf16 MXU operands,
    # a folded first layer and a bf16 writeback, so allow a small tolerance.
    we, be, w1, b1, w2, b2 = params
    emb_ref = x @ we + be
    h_ref = jnp.maximum(emb_ref @ w1 + b1, 0.0)
    q_ref = h_ref @ w2 + b2
    assert q.shape == (batch, action_dim)
    assert jnp.allclose(q, q_ref, atol=3e-2, rtol=3e-2), (
        float(jnp.max(jnp.abs(q - q_ref))))

    print("KERNEL_OK")
</pallas_src>

<mosaic_0001>
module attributes {stable_mosaic.version = 11 : i64} {
  func.func @_dqn_kernel(%arg0: i32, %arg1: memref<16x16xbf16, #tpu.memory_space<vmem>>, %arg2: memref<16x128xbf16, #tpu.memory_space<vmem>>, %arg3: memref<1x128xf32, #tpu.memory_space<vmem>>, %arg4: memref<128x128xbf16, #tpu.memory_space<vmem>>, %arg5: memref<1x128xf32, #tpu.memory_space<vmem>>, %arg6: memref<16x128xbf16, #tpu.memory_space<vmem>>) attributes {dimension_semantics = [#tpu.dimension_semantics<parallel>], iteration_bounds = array<i64: 1>, scalar_prefetch = 0 : i64, scratch_operands = 0 : i64, tpu.core_type = #tpu.core_type<tc>, window_params = [{transform_indices = @transform_0, window_bounds = array<i64: 16, 16>}, {pipeline_mode = #tpu.pipeline_mode<synchronous>, transform_indices = @transform_1, window_bounds = array<i64: 16, 128>}, {pipeline_mode = #tpu.pipeline_mode<synchronous>, transform_indices = @transform_2, window_bounds = array<i64: 1, 128>}, {pipeline_mode = #tpu.pipeline_mode<synchronous>, transform_indices = @transform_3, window_bounds = array<i64: 128, 128>}, {pipeline_mode = #tpu.pipeline_mode<synchronous>, transform_indices = @transform_4, window_bounds = array<i64: 1, 128>}, {transform_indices = @transform_5, window_bounds = array<i64: 16, 128>}]} {
    %c0 = arith.constant 0 : index
    %c0_0 = arith.constant 0 : index
    %0 = vector.load %arg1[%c0, %c0_0] : memref<16x16xbf16, #tpu.memory_space<vmem>>, vector<16x16xbf16>
    %c0_1 = arith.constant 0 : index
    %c0_2 = arith.constant 0 : index
    %1 = vector.load %arg2[%c0_1, %c0_2] : memref<16x128xbf16, #tpu.memory_space<vmem>>, vector<16x128xbf16>
    %cst = arith.constant dense<0.000000e+00> : vector<16x128xf32>
    %2 = tpu.matmul %0, %1, %cst {dimension_numbers = #tpu.dot_dimension_numbers<[1], [0], [0], [1], [0, 0, 1, 1], [], []>} : vector<16x16xbf16>, vector<16x128xbf16>, vector<16x128xf32> -> vector<16x128xf32>
    %c0_3 = arith.constant 0 : index
    %c0_4 = arith.constant 0 : index
    %3 = vector.load %arg3[%c0_3, %c0_4] : memref<1x128xf32, #tpu.memory_space<vmem>>, vector<1x128xf32>
    %4 = vector.broadcast %3 : vector<1x128xf32> to vector<16x128xf32>
    %5 = arith.addf %2, %4 : vector<16x128xf32>
    %cst_5 = arith.constant 0.000000e+00 : f32
    %6 = vector.broadcast %cst_5 : f32 to vector<16x128xf32>
    %7 = arith.maximumf %5, %6 : vector<16x128xf32>
    %8 = arith.truncf %7 : vector<16x128xf32> to vector<16x128xbf16>
    %c0_6 = arith.constant 0 : index
    %c0_7 = arith.constant 0 : index
    %9 = vector.load %arg4[%c0_6, %c0_7] : memref<128x128xbf16, #tpu.memory_space<vmem>>, vector<128x128xbf16>
    %cst_8 = arith.constant dense<0.000000e+00> : vector<16x128xf32>
    %10 = tpu.matmul %8, %9, %cst_8 {dimension_numbers = #tpu.dot_dimension_numbers<[1], [0], [0], [1], [0, 0, 1, 1], [], []>} : vector<16x128xbf16>, vector<128x128xbf16>, vector<16x128xf32> -> vector<16x128xf32>
    %c0_9 = arith.constant 0 : index
    %c0_10 = arith.constant 0 : index
    %11 = vector.load %arg5[%c0_9, %c0_10] : memref<1x128xf32, #tpu.memory_space<vmem>>, vector<1x128xf32>
    %12 = vector.broadcast %11 : vector<1x128xf32> to vector<16x128xf32>
    %13 = arith.addf %10, %12 : vector<16x128xf32>
    %14 = arith.truncf %13 : vector<16x128xf32> to vector<16x128xbf16>
    %c0_11 = arith.constant 0 : index
    %c0_12 = arith.constant 0 : index
    %15 = vector.load %arg6[%c0_11, %c0_12] : memref<16x128xbf16, #tpu.memory_space<vmem>>, vector<16x128xbf16>
    tpu.vector_store %arg6[%c0_11, %c0_12], %14 {strides = array<i32>} : memref<16x128xbf16, #tpu.memory_space<vmem>>, vector<16x128xbf16>,
    return
  }
  func.func @transform_0(%arg0: i32) -> (i32, i32) {
    %c0_i32 = arith.constant 0 : i32
    %c0_i32_0 = arith.constant 0 : i32
    return %arg0, %c0_i32 : i32, i32
  }
  func.func @transform_1(%arg0: i32) -> (i32, i32) {
    %c0_i32 = arith.constant 0 : i32
    %c0_i32_0 = arith.constant 0 : i32
    %c0_i32_1 = arith.constant 0 : i32
    return %c0_i32, %c0_i32_0 : i32, i32
  }
  func.func @transform_2(%arg0: i32) -> (i32, i32) {
    %c0_i32 = arith.constant 0 : i32
    %c0_i32_0 = arith.constant 0 : i32
    %c0_i32_1 = arith.constant 0 : i32
    return %c0_i32, %c0_i32_0 : i32, i32
  }
  func.func @transform_3(%arg0: i32) -> (i32, i32) {
    %c0_i32 = arith.constant 0 : i32
    %c0_i32_0 = arith.constant 0 : i32
    %c0_i32_1 = arith.constant 0 : i32
    return %c0_i32, %c0_i32_0 : i32, i32
  }
  func.func @transform_4(%arg0: i32) -> (i32, i32) {
    %c0_i32 = arith.constant 0 : i32
    %c0_i32_0 = arith.constant 0 : i32
    %c0_i32_1 = arith.constant 0 : i32
    return %c0_i32, %c0_i32_0 : i32, i32
  }
  func.func @transform_5(%arg0: i32) -> (i32, i32) {
    %c0_i32 = arith.constant 0 : i32
    %c0_i32_0 = arith.constant 0 : i32
    return %arg0, %c0_i32 : i32, i32
  }
}

</mosaic_0001>

<llo_original>
// kernel: tpu_custom_call.1
$region0: #{tpu_custom_call.1}
  #allocation0 [shape = 'u32[]', space=smem, size = 0x4, offset = 0x4, fixed_abs, tag = 'smem constant byte address 0x4 - core index']
  #allocation1 [shape = 'u32[72,128]{1,0:T(1,128)}', space=vmem, size = 0x9000, scoped, tag = 'internal scratch']
  %s0 = inlined_call_operand.hbm [shape: bf16[16,16], index: 0, kind: input, shape index: {}]
  %s1 = inlined_call_operand.hbm [shape: bf16[16,128], index: 1, kind: input, shape index: {}]
  %s2 = inlined_call_operand.vmem [shape: f32[1,128], index: 2, kind: input, shape index: {}]
  %s3 = inlined_call_operand.hbm [shape: bf16[128,128], index: 3, kind: input, shape index: {}]
  %s4 = inlined_call_operand.vmem [shape: f32[1,128], index: 4, kind: input, shape index: {}]
  %s5 = inlined_call_operand.hbm [shape: bf16[16,128], index: 5, kind: output, shape index: {}]
  %s6 = sld [smem:[#allocation0]]
  $region42: #{tpu_custom_call.1} parent=0
    _
  %s8 = ssub.s32 1, %s6
  %s9 = scalar_select 0, %s8, %s6
  $region1: #{tpu_custom_call.1} parent=0
    #allocation2 [shape = 'u8[4096]{0}', space=vmem, size = 0x1000, scoped, tag = 'input window, operand 0, single buffered']
    #allocation3 [shape = 's32[1]{0}', space=sflag, size = 0x4, scoped, tag = 'scoped memory for tpu_custom_call.1']
    #allocation4 [shape = 's32[1]{0}', space=sflag, size = 0x4, scoped, tag = 'scoped memory for tpu_custom_call.1']
    #allocation5 [shape = 'u8[4096]{0}', space=vmem, size = 0x1000, scoped, tag = 'input window, operand 1, single buffered']
    #allocation6 [shape = 's32[1]{0}', space=sflag, size = 0x4, scoped, tag = 'scoped memory for tpu_custom_call.1']
    #allocation7 [shape = 'u8[32768]{0}', space=vmem, size = 0x8000, scoped, tag = 'input window, operand 3, single buffered']
    #allocation8 [shape = 'u8[4096]{0}', space=vmem, size = 0x1000, scoped, tag = 'output window, operand 0, single buffered']
    %10 = vsyncpa [#allocation3], 0
    %11 = vsyncpa [#allocation6], 0
    %12 = vsyncpa [#allocation4], 0
    // Predicated region
    $region2: #{tpu_custom_call.1} parent=1 // pred_check
      _
    $region3: #{tpu_custom_call.1} parent=1 // pred_check_branch
      %14 = sbr.rel (0) target = $region5
    $region4: #{tpu_custom_call.1} parent=1 // pred_region
      %16 = vsyncadd [#allocation3], 0
      %s17 = sshll.u32 %s0, 4
      %s18 = int_to_ptr.hbm [resolvable:$true] %s17
      %s19 = sshll.u32 [#allocation2], 4
      %s20 = int_to_ptr.vmem [resolvable:$true] %s19
      %25 = dma.hbm_to_vmem [thread:$0]  %s18, 128, %s20, [#allocation3], 64, 64, 4
    $region5: #{tpu_custom_call.1} parent=1 // pred_fallthru
      _
    // Predicated region
    $region6: #{tpu_custom_call.1} parent=1 // pred_check
      _
    $region7: #{tpu_custom_call.1} parent=1 // pred_check_branch
      %27 = sbr.rel (0) target = $region9
    $region8: #{tpu_custom_call.1} parent=1 // pred_region
      %29 = vsyncadd [#allocation6], 0
      %s30 = sshll.u32 %s1, 4
      %s31 = int_to_ptr.hbm [resolvable:$true] %s30
      %s32 = sshll.u32 [#allocation5], 4
      %s33 = int_to_ptr.vmem [resolvable:$true] %s32
      %38 = dma.hbm_to_vmem [thread:$0]  %s31, 128, %s33, [#allocation6], 64, 64, 4
    $region9: #{tpu_custom_call.1} parent=1 // pred_fallthru
      _
    // Predicated region
    $region10: #{tpu_custom_call.1} parent=1 // pred_check
      _
    $region11: #{tpu_custom_call.1} parent=1 // pred_check_branch
      %40 = sbr.rel (0) target = $region13
    $region12: #{tpu_custom_call.1} parent=1 // pred_region
      _
    $region13: #{tpu_custom_call.1} parent=1 // pred_fallthru
      _
    // Predicated region
    $region14: #{tpu_custom_call.1} parent=1 // pred_check
      _
    $region15: #{tpu_custom_call.1} parent=1 // pred_check_branch
      %42 = sbr.rel (0) target = $region17
    $region16: #{tpu_custom_call.1} parent=1 // pred_region
      %44 = vsyncadd [#allocation6], 0
      %s45 = sshll.u32 %s3, 4
      %s46 = int_to_ptr.hbm [resolvable:$true] %s45
      %s47 = sshll.u32 [#allocation7], 4
      %s48 = int_to_ptr.vmem [resolvable:$true] %s47
      %53 = dma.hbm_to_vmem [thread:$0]  %s46, 1024, %s48, [#allocation6], 64, 64, 4
    $region17: #{tpu_custom_call.1} parent=1 // pred_fallthru
      _
    // Predicated region
    $region18: #{tpu_custom_call.1} parent=1 // pred_check
      _
    $region19: #{tpu_custom_call.1} parent=1 // pred_check_branch
      %55 = sbr.rel (0) target = $region21
    $region20: #{tpu_custom_call.1} parent=1 // pred_region
      _
    $region21: #{tpu_custom_call.1} parent=1 // pred_fallthru
      _
    // Predicated region
    $region22: #{tpu_custom_call.1} parent=1 // pred_check
      _
    $region23: #{tpu_custom_call.1} parent=1 // pred_check_branch
      %57 = sbr.rel (0) target = $region25
    $region24: #{tpu_custom_call.1} parent=1 // pred_region
      %59 = dma.done [#allocation3], 128
    $region25: #{tpu_custom_call.1} parent=1 // pred_fallthru
      _
    // Predicated region
    $region26: #{tpu_custom_call.1} parent=1 // pred_check
      _
    $region27: #{tpu_custom_call.1} parent=1 // pred_check_branch
      %61 = sbr.rel (0) target = $region29
    $region28: #{tpu_custom_call.1} parent=1 // pred_region
      %63 = dma.done [#allocation6], 128
    $region29: #{tpu_custom_call.1} parent=1 // pred_fallthru
      _
    // Predicated region
    $region30: #{tpu_custom_call.1} parent=1 // pred_check
      _
    $region31: #{tpu_custom_call.1} parent=1 // pred_check_branch
      %65 = sbr.rel (0) target = $region33
    $region32: #{tpu_custom_call.1} parent=1 // pred_region
      %67 = dma.done [#allocation6], 1024
    $region33: #{tpu_custom_call.1} parent=1 // pred_fallthru
      _
    %v69 = vld [vmem:[#allocation2] sm:$0xf]
    %v70 = vld [vmem:[#allocation2 + $0x4] sm:$0xf]
    %v71 = vld [vmem:[#allocation5] sm:$0xf]
    %v72 = vld [vmem:[#allocation5 + $0x4] sm:$0xf]
    %v73 = vld [vmem:[%s2] sm:$0x1]
    %v75 = vperm.slane %v73, 0
    %v79 = vunpack.c.l.b16 %v69
    %v80 = vunpack.c.l.b16 %v70
    %v81 = vpack.c.b16 %v80, %v79
    %v84 = vunpack.c.l.b16 %v71
    %v85 = vunpack.c.l.b16 %v72
    %v86 = vpack.c.b16 %v85, %v84
    %vm88 = vcmask 130048
    %v90 = vsel %vm88, %v81, 0
    %92 = vmatpush.bf16.msra.mxu0 0
    %93 = vmatpush.bf16.msra.mxu0 0
    %94 = vmatpush.bf16.msra.mxu0 0
    %95 = vmatpush.bf16.msra.mxu0 0
    %96 = vmatpush.bf16.msra.mxu0 0
    %97 = vmatpush.bf16.msra.mxu0 0
    %98 = vmatpush.bf16.msra.mxu0 0
    %99 = vmatpush.bf16.msra.mxu0 %v86
    %100 = vmatmul.bf16.gmra.mxu0 %v90
    %v101 = vpop.f32.mrf.mxu0
    %v102 = vadd.f32 %v75, %v101
    %v103 = vpop.f32.mrf.mxu0
    %v104 = vadd.f32 %v75, %v103
    %105 = vdwg.mxu0
    %v106 = vmax.f32 %v102, 0.0
    %v107 = vmax.f32 %v104, 0.0
    %v108 = vpack.c.bf16 %v107, %v106
    %v109 = vld [vmem:[#allocation7] sm:$0xf]
    %v110 = vld [vmem:[#allocation7 + $0x4] sm:$0xf]
    %v111 = vld [vmem:[#allocation7 + $0x8] sm:$0xf]
    %v112 = vld [vmem:[#allocation7 + $0xc] sm:$0xf]
    %v113 = vld [vmem:[#allocation7 + $0x10] sm:$0xf]
    %v114 = vld [vmem:[#allocation7 + $0x14] sm:$0xf]
    %v115 = vld [vmem:[#allocation7 + $0x18] sm:$0xf]
    %v116 = vld [vmem:[#allocation7 + $0x1c] sm:$0xf]
    %v117 = vld [vmem:[#allocation7 + $0x20] sm:$0xf]
    %v118 = vld [vmem:[#allocation7 + $0x24] sm:$0xf]
    %v119 = vld [vmem:[#allocation7 + $0x28] sm:$0xf]
    %v120 = vld [vmem:[#allocation7 + $0x2c] sm:$0xf]
    %v121 = vld [vmem:[#allocation7 + $0x30] sm:$0xf]
    %v122 = vld [vmem:[#allocation7 + $0x34] sm:$0xf]
    %v123 = vld [vmem:[#allocation7 + $0x38] sm:$0xf]
    %v124 = vld [vmem:[#allocation7 + $0x3c] sm:$0xf]
    %v125 = vld [vmem:[%s4] sm:$0x1]
    %v127 = vperm.slane %v125, 0
    %v145 = vunpack.c.l.b16 %v109
    %v146 = vunpack.c.l.b16 %v110
    %v147 = vunpack.c.l.b16 %v111
    %v148 = vunpack.c.l.b16 %v112
    %v149 = vunpack.c.l.b16 %v113
    %v150 = vunpack.c.l.b16 %v114
    %v151 = vunpack.c.l.b16 %v115
    %v152 = vunpack.c.l.b16 %v116
    %v153 = vunpack.c.l.b16 %v117
    %v154 = vunpack.c.l.b16 %v118
    %v155 = vunpack.c.l.b16 %v119
    %v156 = vunpack.c.l.b16 %v120
    %v157 = vunpack.c.l.b16 %v121
    %v158 = vunpack.c.l.b16 %v122
    %v159 = vunpack.c.l.b16 %v123
    %v160 = vunpack.c.l.b16 %v124
    %v161 = vpack.c.b16 %v146, %v145
    %v162 = vpack.c.b16 %v148, %v147
    %v163 = vpack.c.b16 %v150, %v149
    %v164 = vpack.c.b16 %v152, %v151
    %v165 = vpack.c.b16 %v154, %v153
    %v166 = vpack.c.b16 %v156, %v155
    %v167 = vpack.c.b16 %v158, %v157
    %v168 = vpack.c.b16 %v160, %v159
    %177 = vmatpush.bf16.msra.mxu0 %v168
    %178 = vmatpush.bf16.msra.mxu0 %v167
    %179 = vmatpush.bf16.msra.mxu0 %v166
    %180 = vmatpush.bf16.msra.mxu0 %v165
    %181 = vmatpush.bf16.msra.mxu0 %v164
    %182 = vmatpush.bf16.msra.mxu0 %v163
    %183 = vmatpush.bf16.msra.mxu0 %v162
    %184 = vmatpush.bf16.msra.mxu0 %v161
    %185 = vmatmul.bf16.gmra.mxu0 %v108
    %v186 = vpop.f32.mrf.mxu0
    %v187 = vadd.f32 %v127, %v186
    %v188 = vpop.f32.mrf.mxu0
    %v189 = vadd.f32 %v127, %v188
    %190 = vdwg.mxu0
    %v191 = vpack.c.bf16 %v187, %v187
    %v192 = vpack.c.bf16 %v189, %v189
    %193 = vst [vmem:[#allocation8] sm:$0xf] %v191
    %194 = vst [vmem:[#allocation8 + $0x4] sm:$0xf] %v192
    // Predicated region
    $region34: #{tpu_custom_call.1} parent=1 // pred_check
      _
    $region35: #{tpu_custom_call.1} parent=1 // pred_check_branch
      %196 = sbr.rel (0) target = $region37
    $region36: #{tpu_custom_call.1} parent=1 // pred_region
      %198 = vsyncadd [#allocation4], 0
      %s199 = sshll.u32 [#allocation8], 4
      %s200 = int_to_ptr.vmem [resolvable:$true] %s199
      %s201 = sshll.u32 %s5, 4
      %s202 = int_to_ptr.hbm [resolvable:$true] %s201
      %207 = dma.vmem_to_hbm [thread:$0]  %s200, 128, %s202, [#allocation4], 64, 64, 4
    $region37: #{tpu_custom_call.1} parent=1 // pred_fallthru
      _
    // Predicated region
    $region38: #{tpu_custom_call.1} parent=1 // pred_check
      _
    $region39: #{tpu_custom_call.1} parent=1 // pred_check_branch
      %209 = sbr.rel (0) target = $region41
    $region40: #{tpu_custom_call.1} parent=1 // pred_region
      %211 = dma.done [#allocation4], 128
    $region41: #{tpu_custom_call.1} parent=1 // pred_fallthru
      _
    %212 = vsyncpa [#allocation3], 1
    %213 = vsyncpa [#allocation6], 1
    %214 = vsyncpa [#allocation4], 1

</llo_original>
